<compile_context>
chip_gen: v7x
topology: tpu7x:2x2x1
jax: 0.10.0
libtpu: 0.0.40
codegen_flags: <defaults>
</compile_context>

<pallas_src>
import numpy as np
import jax
import jax.numpy as jnp
from jax import lax
from jax.experimental import pallas as pl
from jax.experimental.pallas import tpu as pltpu


# ----------------------------------------------------------------------------
# VMEM / tiling planning (generation-aware)
# ----------------------------------------------------------------------------
def _round_up(x, m):
    return (x + m - 1) // m * m


def _vmem_capacity_bytes():
    """Physical per-TensorCore VMEM (v5e/v6e: 128 MiB, v7x: 64 MiB)."""
    try:
        cap = int(getattr(pltpu.get_tpu_info(), "vmem_capacity_bytes", 0))
        if cap > 0:
            return cap
    except Exception:
        pass
    return 64 << 20          # conservative fallback = smallest (v7x per-TC)


def _choose_tile(n, desired, lo=256, hi=1024):
    """Pick a lane-tile width (multiple of 128) and the padded extent.

    Prefers a multiple-of-128 divisor of the 128-rounded extent near `desired` (no extra
    padding); otherwise pads `n` up to a multiple of the chosen tile.  The `lo` floor
    keeps the MXU result dimension filled (MXU is 256 wide on v6e/v7x).
    """
    n128 = _round_up(max(n, 1), 128)
    lo = min(lo, n128)
    desired = max(min(desired, hi, n128), lo)
    best = 128
    for d in range(128, desired + 1, 128):
        if n128 % d == 0:
            best = d
    if best >= max(lo, desired // 2):
        tile = best                               # divides the 128-rounded extent
    elif n128 <= desired + desired // 2:
        tile = n128                               # single tile, modest budget overshoot
    else:
        tile = desired                            # pad n up to a multiple of `desired`
    return tile, _round_up(max(n, tile), tile)


def _upsample_plan(n1, n2, c1, ck, cout):
    """Pick TN1, padded N1 and a vmem limit from the running chip's physical VMEM.

    Working set per tile ~ 5 live (N2, TN1) f32 intermediates (distance/scatter build)
    plus the per-batch resident blocks (p2 lane-padded to 128 lanes, f2/g2) and the
    double-buffered per-tile I/O.
    """
    vmem = _vmem_capacity_bytes()
    target = int(vmem * 0.40)            # tiling budget: leaves room for 2x pipeline bufs
    cap = int(vmem * 0.75)               # never request more than ~75% of physical VMEM
    resident = 4 * 2 * (n2 * 128 + ck * n2)       # p2 (lane-padded) + f2-like, 2x buffered
    budget = max(target - resident, 4 << 20)
    desired = max((budget // (5 * 4 * max(n2, 8))) // 128 * 128, 128)
    tn1, n1p = _choose_tile(n1, desired, lo=256, hi=1024)
    io = 4 * 2 * tn1 * (3 + c1 + cout)
    est = resident + io + 5 * 4 * tn1 * n2
    vmem_limit = int(min(max(int(1.5 * est), 32 << 20), cap))
    return tn1, n1p, vmem_limit


def _pool_plan(n, c, cout):
    vmem = _vmem_capacity_bytes()
    target = int(vmem * 0.40)
    cap = int(vmem * 0.75)
    per_col = 4 * (2 * (c + cout) + 2 * cout)     # dbl-buffered in/out cols + f32 temps
    desired = max((target // max(per_col, 4)) // 128 * 128, 128)
    tn, n_pad = _choose_tile(n, desired, lo=512, hi=4096)
    est = 4 * (2 * tn * (c + cout) + 2 * tn * cout + c * cout)
    vmem_limit = int(min(max(2 * est, 32 << 20), cap))
    return tn, n_pad, vmem_limit


# ----------------------------------------------------------------------------
# Small in-kernel math helpers
# ----------------------------------------------------------------------------
def _erf_f32(x):
    # float32-accurate erf via the Numerical Recipes erfc Chebyshev fit
    # (|rel err| <= 1.2e-7); uses only exp/arith which lower cleanly in Mosaic.
    z = jnp.abs(x)
    t = 1.0 / (1.0 + 0.5 * z)
    poly = -1.26551223 + t * (1.00002368 + t * (0.37409196 + t * (0.09678418 +
           t * (-0.18628806 + t * (0.27886807 + t * (-1.13520398 + t * (1.48851587 +
           t * (-0.82215223 + t * 0.17087277))))))))
    erfc = t * jnp.exp(-z * z + poly)
    erf_abs = 1.0 - erfc
    return jnp.where(x >= 0.0, erf_abs, -erf_abs)


def _gelu_exact(x):
    # nn.GELU() default ("none" approximation): 0.5*x*(1+erf(x/sqrt(2)))
    return 0.5 * x * (1.0 + _erf_f32(x * np.float32(1.0 / np.sqrt(2.0))))


def _gelu_tanh(x):
    # tanh-form GELU: the transcendental goes to the EUP (its own bundle slot) instead of
    # a ~12-op chained VALU erf polynomial.  |err| vs exact GELU <~1e-3 absolute.
    c0 = np.float32(0.7978845608028654)      # sqrt(2/pi)
    c1 = np.float32(0.044715)
    return 0.5 * x * (1.0 + jnp.tanh(c0 * (x + c1 * x * x * x)))


def _scatter_matrix_T(p1t, p2):
    """Gather-free three_nn / three_interpolate weights.

    p1t: (3, TN1) f32 query coords (transposed);  p2: (N2, 3) f32 support coords.
    Returns S: (N2, TN1) f32 with S[j, i] = w_k(i) if j is the k-th nearest support point
    of query i else 0, where w are normalized inverse-squared-distance weights (pointnet2
    three_nn returns squared distances; weight = 1/(d^2+1e-8), normalized).  Built
    directly in (N2, TN1) orientation so no in-kernel transpose is needed.
    """
    n2 = p2.shape[0]
    tn1 = p1t.shape[1]

    # Exact squared pairwise distances by direct differences (matches the reference's
    # (p1-p2)^2 form, no |a|^2+|b|^2-2ab cancellation, no MXU pass needed for K=3).
    d = jnp.zeros((n2, tn1), jnp.float32)
    for k in range(3):
        diff = p2[:, k:k + 1] - p1t[k:k + 1, :]          # (N2,1)-(1,TN1) -> (N2,TN1)
        d = d + diff * diff

    row_i = lax.broadcasted_iota(jnp.int32, (n2, tn1), 0)   # support-point index
    big = jnp.float32(1e30)

    # 3 fused rounds of masked argmin (int32 first-index tie-break, exact semantics): the
    # per-round mask is reused for BOTH the distance knock-out and the unnormalized
    # scatter accumulation; normalization is one broadcast multiply at the end.
    s = jnp.zeros((n2, tn1), jnp.float32)
    recip_sum = jnp.zeros((1, tn1), jnp.float32)
    for _ in range(3):
        dmin = jnp.min(d, axis=0, keepdims=True)                     # (1, TN1)
        idx = jnp.min(jnp.where(d == dmin, row_i, n2),
                      axis=0, keepdims=True)                         # (1, TN1) int32
        mask = row_i == idx                                          # one True per column
        recip = 1.0 / (dmin + 1e-8)                                  # inv squared distance
        s = s + jnp.where(mask, recip, 0.0)
        recip_sum = recip_sum + recip
        d = jnp.where(mask, big, d)
    return s * (1.0 / recip_sum)


# ----------------------------------------------------------------------------
# Kernel 1: upsample=True branch (pf2 given)
# ----------------------------------------------------------------------------
def _make_fp_upsample_kernel(prefold, compute_dtype):
    cd = compute_dtype

    if prefold:
        # f2 already multiplied by the folded weight (output space, Cout <= C2).
        def kernel(p1t_ref, p2_ref, f1_ref, g2_ref, wf1_ref, b_ref, o_ref):
            s = _scatter_matrix_T(p1t_ref[0], p2_ref[0])             # (N2, TN1) f32
            y = jnp.dot(wf1_ref[...].astype(cd), f1_ref[0].astype(cd),
                        preferred_element_type=jnp.float32)          # (Cout, TN1)
            y = y + jnp.dot(g2_ref[0].astype(cd), s.astype(cd),
                            preferred_element_type=jnp.float32)
            o_ref[0] = (y + b_ref[...]).astype(o_ref.dtype)
    else:
        def kernel(p1t_ref, p2_ref, f1_ref, f2_ref, wf1_ref, wf2_ref, b_ref, o_ref):
            s = _scatter_matrix_T(p1t_ref[0], p2_ref[0])             # (N2, TN1) f32
            interp = jnp.dot(f2_ref[0].astype(cd), s.astype(cd),
                             preferred_element_type=jnp.float32)     # (C2, TN1)
            y = jnp.dot(wf1_ref[...].astype(cd), f1_ref[0].astype(cd),
                        preferred_element_type=jnp.float32)          # (Cout, TN1)
            y = y + jnp.dot(wf2_ref[...].astype(cd), interp.astype(cd),
                            preferred_element_type=jnp.float32)
            o_ref[0] = (y + b_ref[...]).astype(o_ref.dtype)
    return kernel


def feature_propagation_upsample(p1, p2, f1, f2, params, *, compute_dtype=jnp.bfloat16,
                                 out_dtype=jnp.float32, tile_n1=None):
    """upsample=True path: convs(cat(f1, three_interpolation(p1, p2, f2)))."""
    w1, s1, b1, w2, s2, b2 = params
    B, N1, _ = p1.shape
    N2 = p2.shape[1]
    C1 = f1.shape[1]
    C2 = f2.shape[1]
    assert N2 >= 3, "three_nn needs at least 3 support points"

    # Fold conv1d(k=1,bias=False)+BN(eval), twice with no activation in between:
    #   y = (s2*w2) @ ((s1*w1) @ x + b1) + b2 = W @ x + b_fold
    a1 = w1 * s1                               # (Cmid, C1+C2)
    a2 = w2 * s2                               # (Cout, Cmid)
    w_fold = a2 @ a1                           # (Cout, C1+C2)
    b_fold = a2 @ b1 + b2                      # (Cout, 1)
    Cout = w_fold.shape[0]
    wf1 = w_fold[:, :C1]                       # f1 half (concat removed)
    wf2 = w_fold[:, C1:]                       # interp half

    # Contract the interpolation matmul in the smaller of {C2, Cout}: interpolation is
    # linear, so the folded weight can be applied to f2 before interpolation.
    prefold = Cout <= C2
    if prefold:
        f2k = jnp.einsum('oc,bcn->bon', wf2, f2)    # (B, Cout, N2); tiny vs interp matmul
        ck = Cout
    else:
        f2k = f2
        ck = C2

    tn1, n1p, vmem_limit = _upsample_plan(N1, N2, C1, ck, Cout)
    if tile_n1 is not None:
        tn1 = tile_n1
        n1p = _round_up(N1, tn1)

    # Pad the query axis to a multiple of the lane tile (full-lane stores, >=1 full tile)
    # and slice the result back.  Padded queries compute garbage but are discarded.
    p1t = jnp.transpose(p1, (0, 2, 1))         # (B, 3, N1); cheap XLA transpose
    pad = n1p - N1
    if pad:
        p1t = jnp.pad(p1t, ((0, 0), (0, 0), (0, pad)))
        f1p = jnp.pad(f1, ((0, 0), (0, 0), (0, pad)))
    else:
        f1p = f1

    grid = (B, n1p // tn1)

    out_isize = jnp.dtype(out_dtype).itemsize
    flops = int(2 * B * n1p * (ck * N2 + Cout * C1 + (0 if prefold else Cout * C2))
                + 15 * B * n1p * N2)
    bytes_accessed = int(4 * (p1t.size + p2.size + f1p.size + f2k.size
                              + w_fold.size + b_fold.size)
                         + out_isize * B * Cout * n1p)
    cost = pl.CostEstimate(flops=flops, transcendentals=int(4 * B * n1p),
                           bytes_accessed=bytes_accessed)

    kernel = _make_fp_upsample_kernel(prefold, compute_dtype)

    # TODO(synk): for very large N2 (multi-thousand) chunk the support axis inside the
    # kernel (running top-3 across N2 chunks + interp accumulation) so the (N2, TN1)
    # intermediates stop bounding TN1 on v7x's 64 MiB VMEM.
    # TODO(synk): the per-batch resident blocks (p2, f2k, weights) could be single
    # buffered (pipeline_mode=pl.Buffered(1)) to reclaim VMEM for a wider TN1 on v7x.
    in_specs = [
        pl.BlockSpec((1, 3, tn1), lambda b, t: (b, 0, t)),    # p1^T tile
        pl.BlockSpec((1, N2, 3), lambda b, t: (b, 0, 0)),     # p2 : resident per batch
        pl.BlockSpec((1, C1, tn1), lambda b, t: (b, 0, t)),   # f1 tile
        pl.BlockSpec((1, ck, N2), lambda b, t: (b, 0, 0)),    # f2 / folded f2 : resident
        pl.BlockSpec((Cout, C1), lambda b, t: (0, 0)),        # folded weight (f1 half)
    ]
    args = [p1t, p2, f1p, f2k, wf1]
    if not prefold:
        in_specs.append(pl.BlockSpec((Cout, C2), lambda b, t: (0, 0)))
        args.append(wf2)
    in_specs.append(pl.BlockSpec((Cout, 1), lambda b, t: (0, 0)))
    args.append(b_fold)

    out = pl.pallas_call(
        kernel,
        out_shape=jax.ShapeDtypeStruct((B, Cout, n1p), out_dtype),
        grid=grid,
        in_specs=in_specs,
        out_specs=pl.BlockSpec((1, Cout, tn1), lambda b, t: (b, 0, t)),
        compiler_params=pltpu.CompilerParams(
            dimension_semantics=("parallel", "parallel"),
            vmem_limit_bytes=vmem_limit),
        cost_estimate=cost,
    )(*args)
    return out[..., :N1] if pad else out


# ----------------------------------------------------------------------------
# Kernel 2: upsample=False branch (pf2 is None)
# ----------------------------------------------------------------------------
def _make_fp_pool_kernel(compute_dtype, approximate_gelu):
    cd = compute_dtype
    act = _gelu_tanh if approximate_gelu else _gelu_exact

    def kernel(f_ref, wa_ref, bias_ref, o_ref):
        h = jnp.dot(wa_ref[...].astype(cd), f_ref[0].astype(cd),
                    preferred_element_type=jnp.float32)           # (Cout, TN)
        h = h + bias_ref[0]                                       # per-batch bias column
        o_ref[0] = act(h).astype(o_ref.dtype)
    return kernel


def feature_propagation_no_upsample(f, params, *, compute_dtype=jnp.bfloat16,
                                    out_dtype=jnp.float32, approximate_gelu=True,
                                    tile_n=None):
    """upsample=False path: linear1(cat(f, relu(linear2(mean(f))).expand(..., N)))."""
    wl2, bl2, w1, s1, b1 = params
    B, C, N = f.shape
    M = wl2.shape[0]
    Cout = w1.shape[0]
    assert w1.shape[1] == C + M

    # Tiny global path (mean-pool + Linear + ReLU) hoisted to plain JAX: it blocks
    # N-tiling inside the kernel and is negligible (B x C) work.  Uses the UNPADDED f.
    g = jnp.maximum(jnp.mean(f, axis=-1) @ wl2.T + bl2[None, :], 0.0)        # (B, M)

    # Fold the BN scale into the conv weight and collapse the broadcast half of the
    # concat into a per-batch bias column:
    #   s1*(W @ [f; g 1^T]) + b1 = (s1*W_f) @ f + (s1*W_g @ g + b1)
    wa = w1[:, :C] * s1                                                      # (Cout, C)
    bias = jnp.einsum('om,bm->bo', w1[:, C:] * s1, g)[..., None] + b1[None]  # (B, Cout, 1)

    tn, n_pad, vmem_limit = _pool_plan(N, C, Cout)
    if tile_n is not None:
        tn = tile_n
        n_pad = _round_up(N, tn)
    pad = n_pad - N
    fp = jnp.pad(f, ((0, 0), (0, 0), (0, pad))) if pad else f
    grid = (B, n_pad // tn)

    out_isize = jnp.dtype(out_dtype).itemsize
    cost = pl.CostEstimate(
        flops=int(2 * B * Cout * C * n_pad),
        transcendentals=int(B * Cout * n_pad),
        bytes_accessed=int(4 * (fp.size + wa.size + bias.size)
                           + out_isize * B * Cout * n_pad))

    out = pl.pallas_call(
        _make_fp_pool_kernel(compute_dtype, approximate_gelu),
        out_shape=jax.ShapeDtypeStruct((B, Cout, n_pad), out_dtype),
        grid=grid,
        in_specs=[pl.BlockSpec((1, C, tn), lambda b, t: (b, 0, t)),
                  pl.BlockSpec((Cout, C), lambda b, t: (0, 0)),
                  pl.BlockSpec((1, Cout, 1), lambda b, t: (b, 0, 0))],
        out_specs=pl.BlockSpec((1, Cout, tn), lambda b, t: (b, 0, t)),
        compiler_params=pltpu.CompilerParams(
            dimension_semantics=("parallel", "parallel"),
            vmem_limit_bytes=vmem_limit),
        cost_estimate=cost,
    )(fp, wa, bias)
    return out[..., :N] if pad else out


# ----------------------------------------------------------------------------
# Pure-JAX references (unfused, f32) for correctness checking
# ----------------------------------------------------------------------------
def ref_upsample(p1, p2, f1, f2, w1, s1, b1, w2, s2, b2):
    def one(p1b, p2b, f1b, f2b):
        d = jnp.sum((p1b[:, None, :] - p2b[None, :, :]) ** 2, axis=-1)   # (N1,N2)
        neg, idx = lax.top_k(-d, 3)                                      # 3 smallest
        d3 = -neg                                                        # squared dists
        recip = 1.0 / (d3 + 1e-8)         # pointnet2 three_nn returns squared distances
        w = recip / jnp.sum(recip, axis=-1, keepdims=True)               # (N1,3)
        gathered = f2b[:, idx]                                           # (C2,N1,3)
        interp = jnp.sum(gathered * w[None], axis=-1)                    # (C2,N1)
        x = jnp.concatenate([f1b, interp], axis=0)
        h = (w1 @ x) * s1 + b1
        return (w2 @ h) * s2 + b2
    return jax.vmap(one)(p1, p2, f1, f2)


def ref_pool(f, wl2, bl2, w1, s1, b1):
    fg = jnp.mean(f, axis=-1)                                            # (B,C)
    g = jnp.maximum(fg @ wl2.T + bl2[None, :], 0.0)                      # (B,M)
    gexp = jnp.broadcast_to(g[:, :, None], (f.shape[0], g.shape[1], f.shape[2]))
    x = jnp.concatenate([f, gexp], axis=1)
    h = jnp.einsum('oc,bcn->bon', w1, x) * s1[None] + b1[None]
    return jax.nn.gelu(h, approximate=False)


# ----------------------------------------------------------------------------
# Deterministic parameter init (conv1d k=1 bias=False + BN1d eval, folded)
# ----------------------------------------------------------------------------
def init_convblock(key, cin, cout, eps=1e-5):
    kw, kg, kb, km, kv = jax.random.split(key, 5)
    w = jax.random.normal(kw, (cout, cin), jnp.float32) * np.float32(1.0 / np.sqrt(cin))
    gamma = 1.0 + 0.1 * jax.random.normal(kg, (cout,), jnp.float32)
    beta = 0.1 * jax.random.normal(kb, (cout,), jnp.float32)
    mean = 0.1 * jax.random.normal(km, (cout,), jnp.float32)
    var = jnp.abs(1.0 + 0.1 * jax.random.normal(kv, (cout,), jnp.float32))
    scale = gamma / jnp.sqrt(var + eps)
    bias = beta - mean * scale
    return w, scale[:, None], bias[:, None]


if __name__ == "__main__":
    key = jax.random.PRNGKey(0)
    k = jax.random.split(key, 12)

    # Kernel feature matmuls run with bf16 operands + f32 accumulation (MXU native) and
    # the pool branch uses the tanh-form GELU, so compare against the f32 / exact-GELU
    # reference with bf16-appropriate tolerances.
    RTOL = ATOL = 3e-2

    # ---------- branch 1: upsample=True, pf2 provided ----------
    B, N1, N2, C1, C2 = 2, 16, 8, 4, 8
    p1 = jax.random.normal(k[0], (B, N1, 3), jnp.float32)
    p2 = jax.random.normal(k[1], (B, N2, 3), jnp.float32)
    f1 = jax.random.normal(k[2], (B, C1, N1), jnp.float32)
    f2 = jax.random.normal(k[3], (B, C2, N2), jnp.float32)

    # (1a) mlp=[12,16,16]: Cout > C2 -> weight-split kernel path
    w1, s1, b1 = init_convblock(k[4], C1 + C2, 16)
    w2, s2, b2 = init_convblock(k[5], 16, 16)
    out_a = jax.block_until_ready(
        feature_propagation_upsample(p1, p2, f1, f2, (w1, s1, b1, w2, s2, b2)))
    with jax.default_matmul_precision("highest"):
        ref_a = jax.block_until_ready(
            ref_upsample(p1, p2, f1, f2, w1, s1, b1, w2, s2, b2))
    np.testing.assert_allclose(np.asarray(out_a), np.asarray(ref_a),
                               rtol=RTOL, atol=ATOL)

    # (1b) mlp=[12,8,4]: Cout < C2 -> pre-folded interpolation kernel path
    w1b, s1b, b1b = init_convblock(k[6], C1 + C2, 8)
    w2b, s2b, b2b = init_convblock(k[7], 8, 4)
    out_b = jax.block_until_ready(
        feature_propagation_upsample(p1, p2, f1, f2, (w1b, s1b, b1b, w2b, s2b, b2b)))
    with jax.default_matmul_precision("highest"):
        ref_b = jax.block_until_ready(
            ref_upsample(p1, p2, f1, f2, w1b, s1b, b1b, w2b, s2b, b2b))
    np.testing.assert_allclose(np.asarray(out_b), np.asarray(ref_b),
                               rtol=RTOL, atol=ATOL)

    # ---------- branch 2: upsample=False, pf2 is None ----------
    C, N = 8, 16
    f = jax.random.normal(k[8], (B, C, N), jnp.float32)
    kl2w, kl2b = jax.random.split(k[9], 2)
    wl2 = jax.random.normal(kl2w, (C, C), jnp.float32) * np.float32(1.0 / np.sqrt(C))
    bl2 = 0.1 * jax.random.normal(kl2b, (C,), jnp.float32)
    wp1, sp1, bp1 = init_convblock(k[10], 2 * C, 16)

    out_p = jax.block_until_ready(
        feature_propagation_no_upsample(f, (wl2, bl2, wp1, sp1, bp1)))
    with jax.default_matmul_precision("highest"):
        ref_p = jax.block_until_ready(ref_pool(f, wl2, bl2, wp1, sp1, bp1))
    np.testing.assert_allclose(np.asarray(out_p), np.asarray(ref_p),
                               rtol=RTOL, atol=ATOL)

    print("KERNEL_OK")
</pallas_src>

<mosaic_0001>
module attributes {stable_mosaic.version = 11 : i64} {
  func.func @kernel(%arg0: i32, %arg1: i32, %arg2: memref<1x3x128xf32, #tpu.memory_space<vmem>>, %arg3: memref<1x8x3xf32, #tpu.memory_space<vmem>>, %arg4: memref<1x4x128xf32, #tpu.memory_space<vmem>>, %arg5: memref<1x8x8xf32, #tpu.memory_space<vmem>>, %arg6: memref<16x4xf32, #tpu.memory_space<vmem>>, %arg7: memref<16x8xf32, #tpu.memory_space<vmem>>, %arg8: memref<16x1xf32, #tpu.memory_space<vmem>>, %arg9: memref<1x16x128xf32, #tpu.memory_space<vmem>>) attributes {dimension_semantics = [#tpu.dimension_semantics<parallel>, #tpu.dimension_semantics<parallel>], iteration_bounds = array<i64: 2, 1>, scalar_prefetch = 0 : i64, scratch_operands = 0 : i64, tpu.core_type = #tpu.core_type<tc>, window_params = [{transform_indices = @transform_0, window_bounds = array<i64: 1, 3, 128>}, {transform_indices = @transform_1, window_bounds = array<i64: 1, 8, 3>}, {transform_indices = @transform_2, window_bounds = array<i64: 1, 4, 128>}, {transform_indices = @transform_3, window_bounds = array<i64: 1, 8, 8>}, {pipeline_mode = #tpu.pipeline_mode<synchronous>, transform_indices = @transform_4, window_bounds = array<i64: 16, 4>}, {pipeline_mode = #tpu.pipeline_mode<synchronous>, transform_indices = @transform_5, window_bounds = array<i64: 16, 8>}, {pipeline_mode = #tpu.pipeline_mode<synchronous>, transform_indices = @transform_6, window_bounds = array<i64: 16, 1>}, {transform_indices = @transform_7, window_bounds = array<i64: 1, 16, 128>}]} {
    %c0 = arith.constant 0 : index
    %c0_0 = arith.constant 0 : index
    %c0_1 = arith.constant 0 : index
    %0 = vector.load %arg2[%c0, %c0_0, %c0_1] : memref<1x3x128xf32, #tpu.memory_space<vmem>>, vector<1x3x128xf32>
    %1 = vector.shape_cast %0 : vector<1x3x128xf32> to vector<3x128xf32>
    %c0_2 = arith.constant 0 : index
    %c0_3 = arith.constant 0 : index
    %c0_4 = arith.constant 0 : index
    %2 = vector.load %arg3[%c0_2, %c0_3, %c0_4] : memref<1x8x3xf32, #tpu.memory_space<vmem>>, vector<1x8x3xf32>
    %3 = vector.shape_cast %2 : vector<1x8x3xf32> to vector<8x3xf32>
    %cst = arith.constant 0.000000e+00 : f32
    %4 = vector.broadcast %cst : f32 to vector<8x128xf32>
    %5 = vector.extract_strided_slice %3 {offsets = [0, 0], sizes = [8, 1], strides = [1, 1]} : vector<8x3xf32> to vector<8x1xf32>
    %6 = vector.extract_strided_slice %1 {offsets = [0, 0], sizes = [1, 128], strides = [1, 1]} : vector<3x128xf32> to vector<1x128xf32>
    %7 = vector.broadcast %5 : vector<8x1xf32> to vector<8x128xf32>
    %8 = vector.broadcast %6 : vector<1x128xf32> to vector<8x128xf32>
    %9 = arith.subf %7, %8 : vector<8x128xf32>
    %10 = arith.mulf %9, %9 : vector<8x128xf32>
    %11 = arith.addf %4, %10 : vector<8x128xf32>
    %12 = vector.extract_strided_slice %3 {offsets = [0, 1], sizes = [8, 1], strides = [1, 1]} : vector<8x3xf32> to vector<8x1xf32>
    %13 = vector.extract_strided_slice %1 {offsets = [1, 0], sizes = [1, 128], strides = [1, 1]} : vector<3x128xf32> to vector<1x128xf32>
    %14 = vector.broadcast %12 : vector<8x1xf32> to vector<8x128xf32>
    %15 = vector.broadcast %13 : vector<1x128xf32> to vector<8x128xf32>
    %16 = arith.subf %14, %15 : vector<8x128xf32>
    %17 = arith.mulf %16, %16 : vector<8x128xf32>
    %18 = arith.addf %11, %17 : vector<8x128xf32>
    %19 = vector.extract_strided_slice %3 {offsets = [0, 2], sizes = [8, 1], strides = [1, 1]} : vector<8x3xf32> to vector<8x1xf32>
    %20 = vector.extract_strided_slice %1 {offsets = [2, 0], sizes = [1, 128], strides = [1, 1]} : vector<3x128xf32> to vector<1x128xf32>
    %21 = vector.broadcast %19 : vector<8x1xf32> to vector<8x128xf32>
    %22 = vector.broadcast %20 : vector<1x128xf32> to vector<8x128xf32>
    %23 = arith.subf %21, %22 : vector<8x128xf32>
    %24 = arith.mulf %23, %23 : vector<8x128xf32>
    %25 = arith.addf %18, %24 : vector<8x128xf32>
    %26 = tpu.iota {dimensions = array<i32: 0>} : vector<8x128xi32>
    %cst_5 = arith.constant 0.000000e+00 : f32
    %27 = vector.broadcast %cst_5 : f32 to vector<8x128xf32>
    %cst_6 = arith.constant 0.000000e+00 : f32
    %28 = vector.broadcast %cst_6 : f32 to vector<1x128xf32>
    %cst_7 = arith.constant dense<0x7F800000> : vector<128xf32>
    %29 = vector.multi_reduction <minimumf>, %25, %cst_7 [0] : vector<8x128xf32> to vector<128xf32>
    %30 = vector.shape_cast %29 : vector<128xf32> to vector<1x128xf32>
    %31 = vector.broadcast %30 : vector<1x128xf32> to vector<8x128xf32>
    %32 = arith.cmpf oeq, %25, %31 : vector<8x128xf32>
    %c8_i32 = arith.constant 8 : i32
    %33 = vector.broadcast %c8_i32 : i32 to vector<8x128xi32>
    %34 = arith.select %32, %26, %33 : vector<8x128xi1>, vector<8x128xi32>
    %cst_8 = arith.constant dense<2147483647> : vector<128xi32>
    %35 = vector.multi_reduction <minsi>, %34, %cst_8 [0] : vector<8x128xi32> to vector<128xi32>
    %36 = vector.shape_cast %35 : vector<128xi32> to vector<1x128xi32>
    %37 = vector.broadcast %36 : vector<1x128xi32> to vector<8x128xi32>
    %38 = arith.cmpi eq, %26, %37 : vector<8x128xi32>
    %cst_9 = arith.constant 9.99999993E-9 : f32
    %39 = vector.broadcast %cst_9 : f32 to vector<1x128xf32>
    %40 = arith.addf %30, %39 : vector<1x128xf32>
    %cst_10 = arith.constant 1.000000e+00 : f32
    %41 = vector.broadcast %cst_10 : f32 to vector<1x128xf32>
    %42 = arith.divf %41, %40 : vector<1x128xf32>
    %cst_11 = arith.constant 0.000000e+00 : f32
    %43 = vector.shape_cast %42 : vector<1x128xf32> to vector<1x128xf32>
    %44 = vector.broadcast %43 : vector<1x128xf32> to vector<8x128xf32>
    %45 = vector.broadcast %cst_11 : f32 to vector<8x128xf32>
    %46 = arith.select %38, %44, %45 : vector<8x128xi1>, vector<8x128xf32>
    %47 = arith.addf %27, %46 : vector<8x128xf32>
    %48 = arith.addf %28, %42 : vector<1x128xf32>
    %cst_12 = arith.constant 1.000000e+30 : f32
    %49 = vector.broadcast %cst_12 : f32 to vector<8x128xf32>
    %50 = arith.select %38, %49, %25 : vector<8x128xi1>, vector<8x128xf32>
    %cst_13 = arith.constant dense<0x7F800000> : vector<128xf32>
    %51 = vector.multi_reduction <minimumf>, %50, %cst_13 [0] : vector<8x128xf32> to vector<128xf32>
    %52 = vector.shape_cast %51 : vector<128xf32> to vector<1x128xf32>
    %53 = vector.broadcast %52 : vector<1x128xf32> to vector<8x128xf32>
    %54 = arith.cmpf oeq, %50, %53 : vector<8x128xf32>
    %c8_i32_14 = arith.constant 8 : i32
    %55 = vector.broadcast %c8_i32_14 : i32 to vector<8x128xi32>
    %56 = arith.select %54, %26, %55 : vector<8x128xi1>, vector<8x128xi32>
    %cst_15 = arith.constant dense<2147483647> : vector<128xi32>
    %57 = vector.multi_reduction <minsi>, %56, %cst_15 [0] : vector<8x128xi32> to vector<128xi32>
    %58 = vector.shape_cast %57 : vector<128xi32> to vector<1x128xi32>
    %59 = vector.broadcast %58 : vector<1x128xi32> to vector<8x128xi32>
    %60 = arith.cmpi eq, %26, %59 : vector<8x128xi32>
    %cst_16 = arith.constant 9.99999993E-9 : f32
    %61 = vector.broadcast %cst_16 : f32 to vector<1x128xf32>
    %62 = arith.addf %52, %61 : vector<1x128xf32>
    %cst_17 = arith.constant 1.000000e+00 : f32
    %63 = vector.broadcast %cst_17 : f32 to vector<1x128xf32>
    %64 = arith.divf %63, %62 : vector<1x128xf32>
    %cst_18 = arith.constant 0.000000e+00 : f32
    %65 = vector.shape_cast %64 : vector<1x128xf32> to vector<1x128xf32>
    %66 = vector.broadcast %65 : vector<1x128xf32> to vector<8x128xf32>
    %67 = vector.broadcast %cst_18 : f32 to vector<8x128xf32>
    %68 = arith.select %60, %66, %67 : vector<8x128xi1>, vector<8x128xf32>
    %69 = arith.addf %47, %68 : vector<8x128xf32>
    %70 = arith.addf %48, %64 : vector<1x128xf32>
    %cst_19 = arith.constant 1.000000e+30 : f32
    %71 = vector.broadcast %cst_19 : f32 to vector<8x128xf32>
    %72 = arith.select %60, %71, %50 : vector<8x128xi1>, vector<8x128xf32>
    %cst_20 = arith.constant dense<0x7F800000> : vector<128xf32>
    %73 = vector.multi_reduction <minimumf>, %72, %cst_20 [0] : vector<8x128xf32> to vector<128xf32>
    %74 = vector.shape_cast %73 : vector<128xf32> to vector<1x128xf32>
    %75 = vector.broadcast %74 : vector<1x128xf32> to vector<8x128xf32>
    %76 = arith.cmpf oeq, %72, %75 : vector<8x128xf32>
    %c8_i32_21 = arith.constant 8 : i32
    %77 = vector.broadcast %c8_i32_21 : i32 to vector<8x128xi32>
    %78 = arith.select %76, %26, %77 : vector<8x128xi1>, vector<8x128xi32>
    %cst_22 = arith.constant dense<2147483647> : vector<128xi32>
    %79 = vector.multi_reduction <minsi>, %78, %cst_22 [0] : vector<8x128xi32> to vector<128xi32>
    %80 = vector.shape_cast %79 : vector<128xi32> to vector<1x128xi32>
    %81 = vector.broadcast %80 : vector<1x128xi32> to vector<8x128xi32>
    %82 = arith.cmpi eq, %26, %81 : vector<8x128xi32>
    %cst_23 = arith.constant 9.99999993E-9 : f32
    %83 = vector.broadcast %cst_23 : f32 to vector<1x128xf32>
    %84 = arith.addf %74, %83 : vector<1x128xf32>
    %cst_24 = arith.constant 1.000000e+00 : f32
    %85 = vector.broadcast %cst_24 : f32 to vector<1x128xf32>
    %86 = arith.divf %85, %84 : vector<1x128xf32>
    %cst_25 = arith.constant 0.000000e+00 : f32
    %87 = vector.shape_cast %86 : vector<1x128xf32> to vector<1x128xf32>
    %88 = vector.broadcast %87 : vector<1x128xf32> to vector<8x128xf32>
    %89 = vector.broadcast %cst_25 : f32 to vector<8x128xf32>
    %90 = arith.select %82, %88, %89 : vector<8x128xi1>, vector<8x128xf32>
    %91 = arith.addf %69, %90 : vector<8x128xf32>
    %92 = arith.addf %70, %86 : vector<1x128xf32>
    %cst_26 = arith.constant 1.000000e+00 : f32
    %93 = vector.broadcast %cst_26 : f32 to vector<1x128xf32>
    %94 = arith.divf %93, %92 : vector<1x128xf32>
    %95 = vector.broadcast %94 : vector<1x128xf32> to vector<8x128xf32>
    %96 = arith.mulf %91, %95 : vector<8x128xf32>
    %c0_27 = arith.constant 0 : index
    %c0_28 = arith.constant 0 : index
    %c0_29 = arith.constant 0 : index
    %97 = vector.load %arg5[%c0_27, %c0_28, %c0_29] : memref<1x8x8xf32, #tpu.memory_space<vmem>>, vector<1x8x8xf32>
    %98 = vector.shape_cast %97 : vector<1x8x8xf32> to vector<8x8xf32>
    %99 = arith.truncf %98 : vector<8x8xf32> to vector<8x8xbf16>
    %100 = arith.truncf %96 : vector<8x128xf32> to vector<8x128xbf16>
    %cst_30 = arith.constant dense<0.000000e+00> : vector<8x128xf32>
    %101 = tpu.matmul %99, %100, %cst_30 {dimension_numbers = #tpu.dot_dimension_numbers<[1], [0], [0], [1], [0, 0, 1, 1], [], []>} : vector<8x8xbf16>, vector<8x128xbf16>, vector<8x128xf32> -> vector<8x128xf32>
    %c0_31 = arith.constant 0 : index
    %c0_32 = arith.constant 0 : index
    %102 = vector.load %arg6[%c0_31, %c0_32] : memref<16x4xf32, #tpu.memory_space<vmem>>, vector<16x4xf32>
    %103 = arith.truncf %102 : vector<16x4xf32> to vector<16x4xbf16>
    %c0_33 = arith.constant 0 : index
    %c0_34 = arith.constant 0 : index
    %c0_35 = arith.constant 0 : index
    %104 = vector.load %arg4[%c0_33, %c0_34, %c0_35] : memref<1x4x128xf32, #tpu.memory_space<vmem>>, vector<1x4x128xf32>
    %105 = vector.shape_cast %104 : vector<1x4x128xf32> to vector<4x128xf32>
    %106 = arith.truncf %105 : vector<4x128xf32> to vector<4x128xbf16>
    %cst_36 = arith.constant dense<0.000000e+00> : vector<16x128xf32>
    %107 = tpu.matmul %103, %106, %cst_36 {dimension_numbers = #tpu.dot_dimension_numbers<[1], [0], [0], [1], [0, 0, 1, 1], [], []>} : vector<16x4xbf16>, vector<4x128xbf16>, vector<16x128xf32> -> vector<16x128xf32>
    %c0_37 = arith.constant 0 : index
    %c0_38 = arith.constant 0 : index
    %108 = vector.load %arg7[%c0_37, %c0_38] : memref<16x8xf32, #tpu.memory_space<vmem>>, vector<16x8xf32>
    %109 = arith.truncf %108 : vector<16x8xf32> to vector<16x8xbf16>
    %110 = arith.truncf %101 : vector<8x128xf32> to vector<8x128xbf16>
    %cst_39 = arith.constant dense<0.000000e+00> : vector<16x128xf32>
    %111 = tpu.matmul %109, %110, %cst_39 {dimension_numbers = #tpu.dot_dimension_numbers<[1], [0], [0], [1], [0, 0, 1, 1], [], []>} : vector<16x8xbf16>, vector<8x128xbf16>, vector<16x128xf32> -> vector<16x128xf32>
    %112 = arith.addf %107, %111 : vector<16x128xf32>
    %c0_40 = arith.constant 0 : index
    %c0_41 = arith.constant 0 : index
    %113 = vector.load %arg8[%c0_40, %c0_41] : memref<16x1xf32, #tpu.memory_space<vmem>>, vector<16x1xf32>
    %114 = vector.broadcast %113 : vector<16x1xf32> to vector<16x128xf32>
    %115 = arith.addf %112, %114 : vector<16x128xf32>
    %c0_42 = arith.constant 0 : index
    %c0_43 = arith.constant 0 : index
    %c0_44 = arith.constant 0 : index
    %116 = vector.load %arg9[%c0_42, %c0_43, %c0_44] : memref<1x16x128xf32, #tpu.memory_space<vmem>>, vector<1x16x128xf32>
    %117 = vector.shape_cast %116 : vector<1x16x128xf32> to vector<16x128xf32>
    %118 = vector.shape_cast %115 : vector<16x128xf32> to vector<1x16x128xf32>
    tpu.vector_store %arg9[%c0_42, %c0_43, %c0_44], %118 {strides = array<i32>} : memref<1x16x128xf32, #tpu.memory_space<vmem>>, vector<1x16x128xf32>,
    return
  }
  func.func @transform_0(%arg0: i32, %arg1: i32) -> (i32, i32, i32) {
    %c0_i32 = arith.constant 0 : i32
    %c0_i32_0 = arith.constant 0 : i32
    return %arg0, %c0_i32, %arg1 : i32, i32, i32
  }
  func.func @transform_1(%arg0: i32, %arg1: i32) -> (i32, i32, i32) {
    %c0_i32 = arith.constant 0 : i32
    %c0_i32_0 = arith.constant 0 : i32
    %c0_i32_1 = arith.constant 0 : i32
    return %arg0, %c0_i32, %c0_i32_0 : i32, i32, i32
  }
  func.func @transform_2(%arg0: i32, %arg1: i32) -> (i32, i32, i32) {
    %c0_i32 = arith.constant 0 : i32
    %c0_i32_0 = arith.constant 0 : i32
    return %arg0, %c0_i32, %arg1 : i32, i32, i32
  }
  func.func @transform_3(%arg0: i32, %arg1: i32) -> (i32, i32, i32) {
    %c0_i32 = arith.constant 0 : i32
    %c0_i32_0 = arith.constant 0 : i32
    %c0_i32_1 = arith.constant 0 : i32
    return %arg0, %c0_i32, %c0_i32_0 : i32, i32, i32
  }
  func.func @transform_4(%arg0: i32, %arg1: i32) -> (i32, i32) {
    %c0_i32 = arith.constant 0 : i32
    %c0_i32_0 = arith.constant 0 : i32
    %c0_i32_1 = arith.constant 0 : i32
    return %c0_i32, %c0_i32_0 : i32, i32
  }
  func.func @transform_5(%arg0: i32, %arg1: i32) -> (i32, i32) {
    %c0_i32 = arith.constant 0 : i32
    %c0_i32_0 = arith.constant 0 : i32
    %c0_i32_1 = arith.constant 0 : i32
    return %c0_i32, %c0_i32_0 : i32, i32
  }
  func.func @transform_6(%arg0: i32, %arg1: i32) -> (i32, i32) {
    %c0_i32 = arith.constant 0 : i32
    %c0_i32_0 = arith.constant 0 : i32
    %c0_i32_1 = arith.constant 0 : i32
    return %c0_i32, %c0_i32_0 : i32, i32
  }
  func.func @transform_7(%arg0: i32, %arg1: i32) -> (i32, i32, i32) {
    %c0_i32 = arith.constant 0 : i32
    %c0_i32_0 = arith.constant 0 : i32
    return %arg0, %c0_i32, %arg1 : i32, i32, i32
  }
}

</mosaic_0001>

<llo_original>
// kernel: tpu_custom_call.1
$region0: #{tpu_custom_call.1}
  #allocation0 [shape = 'u32[]', space=smem, size = 0x4, offset = 0x4, fixed_abs, tag = 'smem constant byte address 0x4 - core index']
  #allocation1 [shape = 'u32[144,128]{1,0:T(1,128)}', space=vmem, size = 0x12000, scoped, tag = 'internal scratch']
  %s0 = inlined_call_operand.vmem [shape: f32[2,3,128], index: 0, kind: input, shape index: {}]
  %s1 = inlined_call_operand.vmem [shape: f32[2,8,3], index: 1, kind: input, shape index: {}]
  %s2 = inlined_call_operand.vmem [shape: f32[2,4,128], index: 2, kind: input, shape index: {}]
  %s3 = inlined_call_operand.vmem [shape: f32[2,8,8], index: 3, kind: input, shape index: {}]
  %s4 = inlined_call_operand.vmem [shape: f32[16,4], index: 4, kind: input, shape index: {}]
  %s5 = inlined_call_operand.vmem [shape: f32[16,8], index: 5, kind: input, shape index: {}]
  %s6 = inlined_call_operand.vmem [shape: f32[16,1], index: 6, kind: input, shape index: {}]
  %s7 = inlined_call_operand.hbm [shape: f32[2,16,128], index: 7, kind: output, shape index: {}]
  %s8 = sld [smem:[#allocation0]]
  $region61: #{tpu_custom_call.1} parent=0
    _
  %s10 = ssub.s32 1, %s8
  %s11 = scalar_select 0, %s10, %s8
  $region1: #{tpu_custom_call.1} parent=0
    #allocation2 [shape = 'u8[16384]{0}', space=vmem, size = 0x4000, scoped, tag = 'output window, operand 0']
    #allocation3 [shape = 's32[2]{0}', space=sflag, size = 0x8, scoped, tag = 'scoped memory for tpu_custom_call.1']
    %12 = vsyncpa [#allocation3], 0
    %s13 = scalar_lea.sflag [#allocation3], 1
    %14 = vsyncpa %s13, 0
    loop: start=0, step=1, limit=4
    $region2: #{tpu_custom_call.1} parent=1 // loop_pre_header
      _
    $region3: #{tpu_custom_call.1} parent=1 // loop_header
      %s16 = sphi 0, %s20
      %p17 = scmp.ge.s32.totalorder %s16, 4
      %s23 = sphi 0, %s35
      %s24 = sphi 0, %s31
      %s25 = sphi 0, %s23
      %s26 = sphi 0, %s24
      %s27 = sphi 0, %s25
      %s28 = sphi 0, %s26
      %s40 = sphi 0, %s42
      %s43 = sphi 0, %s40
      %s44 = sphi 0, %s43
      %s60 = sphi 0, %s44
      %s66 = sphi 0, %s68
      %s69 = sphi 0, %s66
      %s70 = sphi 0, %s69
      %s86 = sphi 0, %s70
      %s94 = sphi 0, %s96
      %s97 = sphi 0, %s94
      %s98 = sphi 0, %s97
      %s114 = sphi 0, %s98
      %s120 = sphi 0, %s122
      %s123 = sphi 0, %s120
      %s124 = sphi 0, %s123
      %s140 = sphi 0, %s124
      %s144 = sphi 0, %s144
      %s146 = sphi 0, %s144
      %s147 = sphi 0, %s146
      %s161 = sphi 0, %s147
      %s165 = sphi 0, %s165
      %s167 = sphi 0, %s165
      %s168 = sphi 0, %s167
      %s182 = sphi 0, %s168
      %s186 = sphi 0, %s186
      %s188 = sphi 0, %s186
      %s189 = sphi 0, %s188
      %s203 = sphi 0, %s189
      %s211 = sphi 0, %s213
      %s214 = sphi 0, %s211
      %s215 = sphi 0, %s214
      %s231 = sphi 0, %s215
    $region4: #{tpu_custom_call.1} parent=1 // loop_header_branch
      %19 = sbr.rel (%p17) target = $region8
    $region5: #{tpu_custom_call.1} parent=1 // loop_body
      %s21 = ssub.s32 %s16, 1
      %s22 = ssub.s32 %s16, 2
      %s29 = sadd.s32 1, %s24
      %p30 = scmp.ge.s32.totalorder %s29, 1
      %s31 = scalar_select %p30, 0, %s29
      %s32 = sadd.s32 1, %s23
      %s33 = scalar_select %p30, %s32, %s23
      %p34 = scmp.ge.s32.totalorder %s33, 2
      %s35 = scalar_select %p34, 0, %s33
      %s36 = ssub.s32 %s23, %s35
      %s37 = ssub.s32 %s24, %s31
      %s38 = sor.u32 %s36, %s37
      %p39 = scmp.eq.s32.totalorder %s38, 0
      %s41 = sadd.s32 %s40, 1
      %s42 = scalar_select %p39, %s40, %s41
      %p45 = pneg %p39
      %p46 = scmp.eq.s32.totalorder %s16, 1
      %p47 = por %p45, %p46
      %p48 = scmp.ne.s32.totalorder %s40, %s43
      %p49 = scmp.eq.s32.totalorder %s16, 0
      %p50 = por %p48, %p49
      %p51 = scmp.ne.s32.totalorder %s40, %s43
      %p52 = scmp.eq.s32.totalorder %s21, 1
      %p53 = por %p51, %p52
      %p54 = scmp.ne.s32.totalorder %s43, %s44
      %p55 = scmp.eq.s32.totalorder %s21, 0
      %p56 = por %p54, %p55
      %p57 = scmp.ne.s32.totalorder %s43, %s44
      %p58 = scmp.eq.s32.totalorder %s22, 1
      %p59 = por %p57, %p58
      %p61 = scmp.ne.s32.totalorder %s44, %s60
      %p62 = scmp.eq.s32.totalorder %s22, 0
      %p63 = por %p61, %p62
      %s64 = ssub.s32 %s23, %s35
      %p65 = scmp.eq.s32.totalorder %s64, 0
      %s67 = sadd.s32 %s66, 1
      %s68 = scalar_select %p65, %s66, %s67
      %p71 = pneg %p65
      %p72 = scmp.eq.s32.totalorder %s16, 1
      %p73 = por %p71, %p72
      %p74 = scmp.ne.s32.totalorder %s66, %s69
      %p75 = scmp.eq.s32.totalorder %s16, 0
      %p76 = por %p74, %p75
      %p77 = scmp.ne.s32.totalorder %s66, %s69
      %p78 = scmp.eq.s32.totalorder %s21, 1
      %p79 = por %p77, %p78
      %p80 = scmp.ne.s32.totalorder %s69, %s70
      %p81 = scmp.eq.s32.totalorder %s21, 0
      %p82 = por %p80, %p81
      %p83 = scmp.ne.s32.totalorder %s69, %s70
      %p84 = scmp.eq.s32.totalorder %s22, 1
      %p85 = por %p83, %p84
      %p87 = scmp.ne.s32.totalorder %s70, %s86
      %p88 = scmp.eq.s32.totalorder %s22, 0
      %p89 = por %p87, %p88
      %s90 = ssub.s32 %s23, %s35
      %s91 = ssub.s32 %s24, %s31
      %s92 = sor.u32 %s90, %s91
      %p93 = scmp.eq.s32.totalorder %s92, 0
      %s95 = sadd.s32 %s94, 1
      %s96 = scalar_select %p93, %s94, %s95
      %p99 = pneg %p93
      %p100 = scmp.eq.s32.totalorder %s16, 1
      %p101 = por %p99, %p100
      %p102 = scmp.ne.s32.totalorder %s94, %s97
      %p103 = scmp.eq.s32.totalorder %s16, 0
      %p104 = por %p102, %p103
      %p105 = scmp.ne.s32.totalorder %s94, %s97
      %p106 = scmp.eq.s32.totalorder %s21, 1
      %p107 = por %p105, %p106
      %p108 = scmp.ne.s32.totalorder %s97, %s98
      %p109 = scmp.eq.s32.totalorder %s21, 0
      %p110 = por %p108, %p109
      %p111 = scmp.ne.s32.totalorder %s97, %s98
      %p112 = scmp.eq.s32.totalorder %s22, 1
      %p113 = por %p111, %p112
      %p115 = scmp.ne.s32.totalorder %s98, %s114
      %p116 = scmp.eq.s32.totalorder %s22, 0
      %p117 = por %p115, %p116
      %s118 = ssub.s32 %s23, %s35
      %p119 = scmp.eq.s32.totalorder %s118, 0
      %s121 = sadd.s32 %s120, 1
      %s122 = scalar_select %p119, %s120, %s121
      %p125 = pneg %p119
      %p126 = scmp.eq.s32.totalorder %s16, 1
      %p127 = por %p125, %p126
      %p128 = scmp.ne.s32.totalorder %s120, %s123
      %p129 = scmp.eq.s32.totalorder %s16, 0
      %p130 = por %p128, %p129
      %p131 = scmp.ne.s32.totalorder %s120, %s123
      %p132 = scmp.eq.s32.totalorder %s21, 1
      %p133 = por %p131, %p132
      %p134 = scmp.ne.s32.totalorder %s123, %s124
      %p135 = scmp.eq.s32.totalorder %s21, 0
      %p136 = por %p134, %p135
      %p137 = scmp.ne.s32.totalorder %s123, %s124
      %p138 = scmp.eq.s32.totalorder %s22, 1
      %p139 = por %p137, %p138
      %p141 = scmp.ne.s32.totalorder %s124, %s140
      %p142 = scmp.eq.s32.totalorder %s22, 0
      %p143 = por %p141, %p142
      %s145 = sadd.s32 %s144, 1
      %p148 = scmp.eq.s32.totalorder %s16, 1
      %p149 = scmp.ne.s32.totalorder %s144, %s146
      %p150 = scmp.eq.s32.totalorder %s16, 0
      %p151 = por %p149, %p150
      %p152 = scmp.ne.s32.totalorder %s144, %s146
      %p153 = scmp.eq.s32.totalorder %s21, 1
      %p154 = por %p152, %p153
      %p155 = scmp.ne.s32.totalorder %s146, %s147
      %p156 = scmp.eq.s32.totalorder %s21, 0
      %p157 = por %p155, %p156
      %p158 = scmp.ne.s32.totalorder %s146, %s147
      %p159 = scmp.eq.s32.totalorder %s22, 1
      %p160 = por %p158, %p159
      %p162 = scmp.ne.s32.totalorder %s147, %s161
      %p163 = scmp.eq.s32.totalorder %s22, 0
      %p164 = por %p162, %p163
      %s166 = sadd.s32 %s165, 1
      %p169 = scmp.eq.s32.totalorder %s16, 1
      %p170 = scmp.ne.s32.totalorder %s165, %s167
      %p171 = scmp.eq.s32.totalorder %s16, 0
      %p172 = por %p170, %p171
      %p173 = scmp.ne.s32.totalorder %s165, %s167
      %p174 = scmp.eq.s32.totalorder %s21, 1
      %p175 = por %p173, %p174
      %p176 = scmp.ne.s32.totalorder %s167, %s168
      %p177 = scmp.eq.s32.totalorder %s21, 0
      %p178 = por %p176, %p177
      %p179 = scmp.ne.s32.totalorder %s167, %s168
      %p180 = scmp.eq.s32.totalorder %s22, 1
      %p181 = por %p179, %p180
      %p183 = scmp.ne.s32.totalorder %s168, %s182
      %p184 = scmp.eq.s32.totalorder %s22, 0
      %p185 = por %p183, %p184
      %s187 = sadd.s32 %s186, 1
      %p190 = scmp.eq.s32.totalorder %s16, 1
      %p191 = scmp.ne.s32.totalorder %s186, %s188
      %p192 = scmp.eq.s32.totalorder %s16, 0
      %p193 = por %p191, %p192
      %p194 = scmp.ne.s32.totalorder %s186, %s188
      %p195 = scmp.eq.s32.totalorder %s21, 1
      %p196 = por %p194, %p195
      %p197 = scmp.ne.s32.totalorder %s188, %s189
      %p198 = scmp.eq.s32.totalorder %s21, 0
      %p199 = por %p197, %p198
      %p200 = scmp.ne.s32.totalorder %s188, %s189
      %p201 = scmp.eq.s32.totalorder %s22, 1
      %p202 = por %p200, %p201
      %p204 = scmp.ne.s32.totalorder %s189, %s203
      %p205 = scmp.eq.s32.totalorder %s22, 0
      %p206 = por %p204, %p205
      %s207 = ssub.s32 %s23, %s35
      %s208 = ssub.s32 %s24, %s31
      %s209 = sor.u32 %s207, %s208
      %p210 = scmp.eq.s32.totalorder %s209, 0
      %s212 = sadd.s32 %s211, 1
      %s213 = scalar_select %p210, %s211, %s212
      %p216 = pneg %p210
      %p217 = scmp.eq.s32.totalorder %s16, 1
      %p218 = por %p216, %p217
      %p219 = scmp.ne.s32.totalorder %s211, %s214
      %p220 = scmp.eq.s32.totalorder %s16, 0
      %p221 = por %p219, %p220
      %p222 = scmp.ne.s32.totalorder %s211, %s214
      %p223 = scmp.eq.s32.totalorder %s21, 1
      %p224 = por %p222, %p223
      %p225 = scmp.ne.s32.totalorder %s214, %s215
      %p226 = scmp.eq.s32.totalorder %s21, 0
      %p227 = por %p225, %p226
      %p228 = scmp.ne.s32.totalorder %s214, %s215
      %p229 = scmp.eq.s32.totalorder %s22, 1
      %p230 = por %p228, %p229
      %p232 = scmp.ne.s32.totalorder %s215, %s231
      %p233 = scmp.eq.s32.totalorder %s22, 0
      %p234 = por %p232, %p233
      %p235 = scmp.le.s32.totalorder 1, %s16
      %p236 = scmp.lt.s32.totalorder %s16, 3
      %p237 = pnand %p235, %p236
      %p238 = pneg %p237
      // Predicated region
      $region9: #{tpu_custom_call.1} parent=5 // pred_check
        _
      $region10: #{tpu_custom_call.1} parent=5 // pred_check_branch
        %240 = sbr.rel (%p237) target = $region12
      $region11: #{tpu_custom_call.1} parent=5 // pred_region
        %s241 = ssub.s32 %s16, 1
        // Predicated region
        $region13: #{tpu_custom_call.1} parent=11 // pred_check
          %p242 = pneg %p157
        $region14: #{tpu_custom_call.1} parent=11 // pred_check_branch
          %244 = sbr.rel (%p242) target = $region16
        $region15: #{tpu_custom_call.1} parent=11 // pred_region
          _
        $region16: #{tpu_custom_call.1} parent=11 // pred_fallthru
          _
        // Predicated region
        $region17: #{tpu_custom_call.1} parent=11 // pred_check
          %p245 = pneg %p178
        $region18: #{tpu_custom_call.1} parent=11 // pred_check_branch
          %247 = sbr.rel (%p245) target = $region20
        $region19: #{tpu_custom_call.1} parent=11 // pred_region
          _
        $region20: #{tpu_custom_call.1} parent=11 // pred_fallthru
          _
        // Predicated region
        $region21: #{tpu_custom_call.1} parent=11 // pred_check
          %p248 = pneg %p199
        $region22: #{tpu_custom_call.1} parent=11 // pred_check_branch
          %250 = sbr.rel (%p248) target = $region24
        $region23: #{tpu_custom_call.1} parent=11 // pred_region
          _
        $region24: #{tpu_custom_call.1} parent=11 // pred_fallthru
          _
      $region12: #{tpu_custom_call.1} parent=5 // pred_fallthru
        _
      %p251 = scmp.lt.s32.totalorder %s16, 2
      // Predicated region
      $region25: #{tpu_custom_call.1} parent=5 // pred_check
        %p252 = pneg %p251
      $region26: #{tpu_custom_call.1} parent=5 // pred_check_branch
        %254 = sbr.rel (%p252) target = $region28
      $region27: #{tpu_custom_call.1} parent=5 // pred_region
        // Predicated region
        $region29: #{tpu_custom_call.1} parent=27 // pred_check
          %p255 = pneg %p50
        $region30: #{tpu_custom_call.1} parent=27 // pred_check_branch
          %257 = sbr.rel (%p255) target = $region32
        $region31: #{tpu_custom_call.1} parent=27 // pred_region
          %p258 = scmp.lt.s32.totalorder %s23, 1
          %s259 = scalar_select %p258, %s23, 1
          %p260 = scmp.lt.s32.totalorder %s24, 0
          %s261 = scalar_select %p260, %s24, 0
          %s262 = sadd.s32 %s261, %s259
          %s263 = smul.addr %s262, 4
          %s264 = scalar_lea.vmem %s0, %s263
        $region32: #{tpu_custom_call.1} parent=27 // pred_fallthru
          _
        // Predicated region
        $region33: #{tpu_custom_call.1} parent=27 // pred_check
          %p265 = pneg %p76
        $region34: #{tpu_custom_call.1} parent=27 // pred_check_branch
          %267 = sbr.rel (%p265) target = $region36
        $region35: #{tpu_custom_call.1} parent=27 // pred_region
          %p268 = scmp.lt.s32.totalorder %s23, 1
          %s269 = scalar_select %p268, %s23, 1
          %s270 = smul.addr %s269, 8
          %s271 = scalar_lea.vmem %s1, %s270
        $region36: #{tpu_custom_call.1} parent=27 // pred_fallthru
          _
        // Predicated region
        $region37: #{tpu_custom_call.1} parent=27 // pred_check
          %p272 = pneg %p104
        $region38: #{tpu_custom_call.1} parent=27 // pred_check_branch
          %274 = sbr.rel (%p272) target = $region40
        $region39: #{tpu_custom_call.1} parent=27 // pred_region
          %p275 = scmp.lt.s32.totalorder %s23, 1
          %s276 = scalar_select %p275, %s23, 1
          %p277 = scmp.lt.s32.totalorder %s24, 0
          %s278 = scalar_select %p277, %s24, 0
          %s279 = sadd.s32 %s278, %s276
          %s280 = smul.addr %s279, 4
          %s281 = scalar_lea.vmem %s2, %s280
        $region40: #{tpu_custom_call.1} parent=27 // pred_fallthru
          _
        // Predicated region
        $region41: #{tpu_custom_call.1} parent=27 // pred_check
          %p282 = pneg %p130
        $region42: #{tpu_custom_call.1} parent=27 // pred_check_branch
          %284 = sbr.rel (%p282) target = $region44
        $region43: #{tpu_custom_call.1} parent=27 // pred_region
          %p285 = scmp.lt.s32.totalorder %s23, 1
          %s286 = scalar_select %p285, %s23, 1
          %s287 = smul.addr %s286, 8
          %s288 = scalar_lea.vmem %s3, %s287
        $region44: #{tpu_custom_call.1} parent=27 // pred_fallthru
          _
      $region28: #{tpu_custom_call.1} parent=5 // pred_fallthru
        _
      %p289 = scmp.le.s32.totalorder 1, %s16
      %p290 = scmp.lt.s32.totalorder %s16, 3
      %p291 = pnand %p289, %p290
      %p292 = pneg %p291
      // Predicated region
      $region45: #{tpu_custom_call.1} parent=5 // pred_check
        _
      $region46: #{tpu_custom_call.1} parent=5 // pred_check_branch
        %294 = sbr.rel (%p291) target = $region48
      $region47: #{tpu_custom_call.1} parent=5 // pred_region
        %s295 = ssub.s32 %s16, 1
        %p296 = scmp.lt.s32.totalorder %s25, 1
        %s297 = scalar_select %p296, %s25, 1
        %p298 = scmp.lt.s32.totalorder %s26, 0
        %s299 = scalar_select %p298, %s26, 0
        %s300 = sadd.s32 %s299, %s297
        %s301 = smul.addr %s300, 4
        %s302 = scalar_lea.vmem %s0, %s301
        %p303 = pneg %p56
        %p304 = pneg %p53
        %p305 = scmp.lt.s32.totalorder %s25, 1
        %s306 = scalar_select %p305, %s25, 1
        %s307 = smul.addr %s306, 8
        %s308 = scalar_lea.vmem %s1, %s307
        %p309 = pneg %p82
        %p310 = pneg %p79
        %p311 = scmp.lt.s32.totalorder %s25, 1
        %s312 = scalar_select %p311, %s25, 1
        %p313 = scmp.lt.s32.totalorder %s26, 0
        %s314 = scalar_select %p313, %s26, 0
        %s315 = sadd.s32 %s314, %s312
        %s316 = smul.addr %s315, 4
        %s317 = scalar_lea.vmem %s2, %s316
        %p318 = pneg %p110
        %p319 = pneg %p107
        %p320 = scmp.lt.s32.totalorder %s25, 1
        %s321 = scalar_select %p320, %s25, 1
        %s322 = smul.addr %s321, 8
        %s323 = scalar_lea.vmem %s3, %s322
        %p324 = pneg %p136
        %p325 = pneg %p133
        %p326 = pneg %p157
        %p327 = pneg %p154
        %p328 = pneg %p178
        %p329 = pneg %p175
        %p330 = pneg %p199
        %p331 = pneg %p196
        %p332 = pneg %p227
        %p333 = pneg %p224
        %s334 = sand.u32 %s214, 1
        %s335 = scalar_lea.sflag [#allocation3], %s334
        %s336 = sand.u32 %s214, 1
        %s337 = smul.addr %s336, 16
        %s338 = scalar_lea.vmem [#allocation2], %s337
        %p339 = scmp.lt.s32.totalorder %s25, 1
        %s340 = scalar_select %p339, %s25, 1
        %p341 = scmp.lt.s32.totalorder %s26, 0
        %s342 = scalar_select %p341, %s26, 0
        %s343 = sadd.s32 %s342, %s340
        %s344 = smul.addr %s343, 4
        %s345 = scalar_lea.vmem %s0, %s344
        %p346 = scmp.lt.s32.totalorder %s25, 1
        %s347 = scalar_select %p346, %s25, 1
        %s348 = smul.addr %s347, 8
        %s349 = scalar_lea.vmem %s1, %s348
        %p350 = scmp.lt.s32.totalorder %s25, 1
        %s351 = scalar_select %p350, %s25, 1
        %p352 = scmp.lt.s32.totalorder %s26, 0
        %s353 = scalar_select %p352, %s26, 0
        %s354 = sadd.s32 %s353, %s351
        %s355 = smul.addr %s354, 4
        %s356 = scalar_lea.vmem %s2, %s355
        %p357 = scmp.lt.s32.totalorder %s25, 1
        %s358 = scalar_select %p357, %s25, 1
        %s359 = smul.addr %s358, 8
        %s360 = scalar_lea.vmem %s3, %s359
        %v362 = vld [vmem:[%s345] sm:$0x7]
        %v363 = vld [vmem:[%s349] sm:$0xff]
        %365 = vset.pattern.permute.xlu0 0
        %366 = vperm.xlu0 %365, %v363
        %v367 = vpop.permute.xlu0 %366
        %v369 = vlaneseq
        %v370 = vshrl.u32 %v369, 7
        %v371 = vsub.s32 0, %v370
        %v372 = vrot.slane %v362, %v371
        %v373 = vsub.f32 %v367, %v372
        %v374 = vmul.f32 %v373, %v373
        %v375 = vadd.f32 %v374, 0.0
        %376 = vset.pattern.permute.xlu0 1
        %377 = vperm.xlu0 %376, %v363
        %v378 = vpop.permute.xlu0 %377
        %v380 = vlaneseq
        %v381 = vshrl.u32 %v380, 7
        %v382 = vsub.s32 1, %v381
        %v383 = vrot.slane %v362, %v382
        %v384 = vsub.f32 %v378, %v383
        %v385 = vmul.f32 %v384, %v384
        %v386 = vadd.f32 %v375, %v385
        %387 = vset.pattern.permute.xlu0 2
        %388 = vperm.xlu0 %387, %v363
        %v389 = vpop.permute.xlu0 %388
        %v391 = vlaneseq
        %v392 = vshrl.u32 %v391, 7
        %v393 = vsub.s32 2, %v392
        %v394 = vrot.slane %v362, %v393
        %v395 = vsub.f32 %v389, %v394
        %v396 = vmul.f32 %v395, %v395
        %v397 = vadd.f32 %v386, %v396
        %v398 = vlaneseq
        %v399 = vshrl.u32 %v398, 7
        %v400 = vrot.slane %v397, 4
        %v401 = vmin.f32 %v397, %v400
        %v402 = vrot.slane %v401, 2
        %v403 = vmin.f32 %v401, %v402
        %v404 = vrot.slane %v403, 1
        %v405 = vmin.f32 %v403, %v404
        %vm406 = vcmp.eq.f32.partialorder %v397, %v405
        %v407 = vsel %vm406, %v399, 8
        %v408 = vrot.slane %v407, 4
        %vm409 = vcmp.lt.s32.totalorder %v407, %v408
        %v410 = vsel %vm409, %v407, %v408
        %v411 = vrot.slane %v410, 2
        %vm412 = vcmp.lt.s32.totalorder %v410, %v411
        %v413 = vsel %vm412, %v410, %v411
        %v414 = vrot.slane %v413, 1
        %vm415 = vcmp.lt.s32.totalorder %v413, %v414
        %v416 = vsel %vm415, %v413, %v414
        %vm417 = vcmp.eq.s32.totalorder %v399, %v416
        %v418 = vadd.f32 %v405, 1e-08
        %v419 = vrcp.pop %v418
        %v420 = vmul.f32 1.0, %v419
        %v421 = vsel %vm417, %v420, 0.0
        %v422 = vadd.f32 %v421, 0.0
        %v423 = vadd.f32 %v420, 0.0
        %v424 = vsel %vm417, 1e+30, %v397
        %v425 = vrot.slane %v424, 4
        %v426 = vmin.f32 %v424, %v425
        %v427 = vrot.slane %v426, 2
        %v428 = vmin.f32 %v426, %v427
        %v429 = vrot.slane %v428, 1
        %v430 = vmin.f32 %v428, %v429
        %vm431 = vcmp.eq.f32.partialorder %v424, %v430
        %v432 = vsel %vm431, %v399, 8
        %v433 = vrot.slane %v432, 4
        %vm434 = vcmp.lt.s32.totalorder %v432, %v433
        %v435 = vsel %vm434, %v432, %v433
        %v436 = vrot.slane %v435, 2
        %vm437 = vcmp.lt.s32.totalorder %v435, %v436
        %v438 = vsel %vm437, %v435, %v436
        %v439 = vrot.slane %v438, 1
        %vm440 = vcmp.lt.s32.totalorder %v438, %v439
        %v441 = vsel %vm440, %v438, %v439
        %vm442 = vcmp.eq.s32.totalorder %v399, %v441
        %v443 = vadd.f32 %v430, 1e-08
        %v444 = vrcp.pop %v443
        %v445 = vmul.f32 1.0, %v444
        %v446 = vsel %vm442, %v445, 0.0
        %v447 = vadd.f32 %v422, %v446
        %v448 = vadd.f32 %v423, %v445
        %v449 = vsel %vm442, 1e+30, %v424
        %v450 = vrot.slane %v449, 4
        %v451 = vmin.f32 %v449, %v450
        %v452 = vrot.slane %v451, 2
        %v453 = vmin.f32 %v451, %v452
        %v454 = vrot.slane %v453, 1
        %v455 = vmin.f32 %v453, %v454
        %vm456 = vcmp.eq.f32.partialorder %v449, %v455
        %v457 = vsel %vm456, %v399, 8
        %v458 = vrot.slane %v457, 4
        %vm459 = vcmp.lt.s32.totalorder %v457, %v458
        %v460 = vsel %vm459, %v457, %v458
        %v461 = vrot.slane %v460, 2
        %vm462 = vcmp.lt.s32.totalorder %v460, %v461
        %v463 = vsel %vm462, %v460, %v461
        %v464 = vrot.slane %v463, 1
        %vm465 = vcmp.lt.s32.totalorder %v463, %v464
        %v466 = vsel %vm465, %v463, %v464
        %vm467 = vcmp.eq.s32.totalorder %v399, %v466
        %v468 = vadd.f32 %v455, 1e-08
        %v469 = vrcp.pop %v468
        %v470 = vmul.f32 1.0, %v469
        %v471 = vsel %vm467, %v470, 0.0
        %v472 = vadd.f32 %v447, %v471
        %v473 = vadd.f32 %v448, %v470
        %v474 = vrcp.pop %v473
        %v475 = vmul.f32 1.0, %v474
        %v476 = vmul.f32 %v472, %v475
        %v477 = vld [vmem:[%s360] sm:$0xff]
        %v478 = vpack.c.bf16 %v477, %v477
        %v479 = vpack.c.bf16 %v476, %v476
        %vm480 = vcmask 64512
        %v482 = vsel %vm480, %v478, 0
        %vm484 = vcmask 1043456
        %v486 = vsel %vm484, %v479, 0
        %488 = vmatprep.subr.bf16.mxu0 0
        %489 = vmatpush1.bf16.msra.mxu0 %v486
        %490 = vmatprep.subr.bf16.mxu0 0
        %491 = vmatpush1.bf16.msra.mxu0 0
        %492 = vmatprep.subr.bf16.mxu0 0
        %493 = vmatpush1.bf16.msra.mxu0 0
        %494 = vmatprep.subr.bf16.mxu0 0
        %495 = vmatpush1.bf16.msra.mxu0 0
        %496 = vmatprep.subr.bf16.mxu0 0
        %497 = vmatpush1.bf16.msra.mxu0 0
        %498 = vmatprep.subr.bf16.mxu0 0
        %499 = vmatpush1.bf16.msra.mxu0 0
        %500 = vmatprep.subr.bf16.mxu0 0
        %501 = vmatpush1.bf16.msra.mxu0 0
        %502 = vmatprep.subr.bf16.mxu0 0
        %503 = vmatpush1.bf16.msra.mxu0 0
        %504 = vmatprep.subr.bf16.mxu0 0
        %505 = vmatpush1.bf16.msra.mxu0 0
        %506 = vmatprep.subr.bf16.mxu0 0
        %507 = vmatpush1.bf16.msra.mxu0 0
        %508 = vmatprep.subr.bf16.mxu0 0
        %509 = vmatpush1.bf16.msra.mxu0 0
        %510 = vmatprep.subr.bf16.mxu0 0
        %511 = vmatpush1.bf16.msra.mxu0 0
        %512 = vmatprep.subr.bf16.mxu0 0
        %513 = vmatpush1.bf16.msra.mxu0 0
        %514 = vmatprep.subr.bf16.mxu0 0
        %515 = vmatpush1.bf16.msra.mxu0 0
        %516 = vmatprep.subr.bf16.mxu0 0
        %517 = vmatpush1.bf16.msra.mxu0 0
        %518 = vmatprep.subr.bf16.mxu0 0
        %519 = vmatpush1.bf16.msra.mxu0 0
        %520 = vmatprep.mubr.bf16.mxu0 0
        %521 = vmatmul.mubr.bf16.gmra.mrb[0].mxu0 %v482
        %v522 = vpop.f32.mrb[0].mxu0
        %v523 = vadd.f32 0.0, %v522
        %v524 = vpop.f32.mrb[0].mxu0
        %v525 = vpop.f32.mrb[0].mxu0
        %v526 = vpop.f32.mrb[0].mxu0
        %527 = vdwg.mxu0
        %v528 = vld [vmem:[%s4] sm:$0xff]
        %v529 = vld [vmem:[%s4 + $0x8] sm:$0xff]
        %v530 = vpack.c.bf16 %v529, %v528
        %v531 = vld [vmem:[%s356] sm:$0xf]
        %v532 = vpack.c.bf16 %v531, %v531
        %v533 = vld [vmem:[%s5] sm:$0xff]
        %v534 = vld [vmem:[%s5 + $0x8] sm:$0xff]
        %v535 = vpack.c.bf16 %v534, %v533
        %v536 = vpack.c.bf16 %v523, %v523
        %v538 = vsel %vm480, %v535, 0
        %v541 = vsel %vm484, %v536, 0
        %543 = vmatprep.subr.bf16.mxu0 0
        %544 = vmatpush1.bf16.msra.mxu0 %v541
        %545 = vmatprep.subr.bf16.mxu0 0
        %546 = vmatpush1.bf16.msra.mxu0 0
        %547 = vmatprep.subr.bf16.mxu0 0
        %548 = vmatpush1.bf16.msra.mxu0 0
        %549 = vmatprep.subr.bf16.mxu0 0
        %550 = vmatpush1.bf16.msra.mxu0 0
        %551 = vmatprep.subr.bf16.mxu0 0
        %552 = vmatpush1.bf16.msra.mxu0 0
        %553 = vmatprep.subr.bf16.mxu0 0
        %554 = vmatpush1.bf16.msra.mxu0 0
        %555 = vmatprep.subr.bf16.mxu0 0
        %556 = vmatpush1.bf16.msra.mxu0 0
        %557 = vmatprep.subr.bf16.mxu0 0
        %558 = vmatpush1.bf16.msra.mxu0 0
        %559 = vmatprep.subr.bf16.mxu0 0
        %560 = vmatpush1.bf16.msra.mxu0 0
        %561 = vmatprep.subr.bf16.mxu0 0
        %562 = vmatpush1.bf16.msra.mxu0 0
        %563 = vmatprep.subr.bf16.mxu0 0
        %564 = vmatpush1.bf16.msra.mxu0 0
        %565 = vmatprep.subr.bf16.mxu0 0
        %566 = vmatpush1.bf16.msra.mxu0 0
        %567 = vmatprep.subr.bf16.mxu0 0
        %568 = vmatpush1.bf16.msra.mxu0 0
        %569 = vmatprep.subr.bf16.mxu0 0
        %570 = vmatpush1.bf16.msra.mxu0 0
        %571 = vmatprep.subr.bf16.mxu0 0
        %572 = vmatpush1.bf16.msra.mxu0 0
        %573 = vmatprep.subr.bf16.mxu0 0
        %574 = vmatpush1.bf16.msra.mxu0 0
        %575 = vmatprep.mubr.bf16.mxu0 0
        %576 = vmatmul.mubr.bf16.gmra.mrb[0].mxu0 %v538
        %v577 = vpop.f32.mrb[0].mxu0
        %v578 = vadd.f32 0.0, %v577
        %v579 = vpop.f32.mrb[0].mxu0
        %v580 = vpop.f32.mrb[0].mxu0
        %v581 = vadd.f32 0.0, %v580
        %v582 = vpop.f32.mrb[0].mxu0
        %583 = vdwg.mxu0
        %vm584 = vcmask 31744
        %v586 = vsel %vm584, %v530, 0
        %vm588 = vcmask 1041408
        %v590 = vsel %vm588, %v532, 0
        %592 = vmatprep.subr.bf16.mxu0 0
        %593 = vmatpush1.bf16.msra.mxu0 %v590
        %594 = vmatprep.subr.bf16.mxu0 0
        %595 = vmatpush1.bf16.msra.mxu0 0
        %596 = vmatprep.subr.bf16.mxu0 0
        %597 = vmatpush1.bf16.msra.mxu0 0
        %598 = vmatprep.subr.bf16.mxu0 0
        %599 = vmatpush1.bf16.msra.mxu0 0
        %600 = vmatprep.subr.bf16.mxu0 0
        %601 = vmatpush1.bf16.msra.mxu0 0
        %602 = vmatprep.subr.bf16.mxu0 0
        %603 = vmatpush1.bf16.msra.mxu0 0
        %604 = vmatprep.subr.bf16.mxu0 0
        %605 = vmatpush1.bf16.msra.mxu0 0
        %606 = vmatprep.subr.bf16.mxu0 0
        %607 = vmatpush1.bf16.msra.mxu0 0
        %608 = vmatprep.subr.bf16.mxu0 0
        %609 = vmatpush1.bf16.msra.mxu0 0
        %610 = vmatprep.subr.bf16.mxu0 0
        %611 = vmatpush1.bf16.msra.mxu0 0
        %612 = vmatprep.subr.bf16.mxu0 0
        %613 = vmatpush1.bf16.msra.mxu0 0
        %614 = vmatprep.subr.bf16.mxu0 0
        %615 = vmatpush1.bf16.msra.mxu0 0
        %616 = vmatprep.subr.bf16.mxu0 0
        %617 = vmatpush1.bf16.msra.mxu0 0
        %618 = vmatprep.subr.bf16.mxu0 0
        %619 = vmatpush1.bf16.msra.mxu0 0
        %620 = vmatprep.subr.bf16.mxu0 0
        %621 = vmatpush1.bf16.msra.mxu0 0
        %622 = vmatprep.subr.bf16.mxu0 0
        %623 = vmatpush1.bf16.msra.mxu0 0
        %624 = vmatprep.mubr.bf16.mxu0 0
        %625 = vmatmul.mubr.bf16.gmra.mrb[0].mxu0 %v586
        %v626 = vpop.f32.mrb[0].mxu0
        %v627 = vadd.f32 %v578, %v626
        %v628 = vpop.f32.mrb[0].mxu0
        %v629 = vpop.f32.mrb[0].mxu0
        %v630 = vadd.f32 %v581, %v629
        %v631 = vpop.f32.mrb[0].mxu0
        %632 = vdwg.mxu0
        %v633 = vld [vmem:[%s6] sm:$0xff]
        %v634 = vld [vmem:[%s6 + $0x8] sm:$0xff]
        %636 = vset.pattern.permute.xlu0 0
        %637 = vperm.xlu0 %636, %v633
        %v638 = vpop.permute.xlu0 %637
        %641 = vset.pattern.permute.xlu0 0
        %642 = vperm.xlu0 %641, %v634
        %v643 = vpop.permute.xlu0 %642
        %v645 = vadd.f32 %v627, %v638
        %v646 = vadd.f32 %v630, %v643
        %647 = vst [vmem:[%s338] sm:$0xff] %v645
        %648 = vst [vmem:[%s338 + $0x8] sm:$0xff] %v646
        %s649 = sand.u32 %s214, 1
        %s650 = scalar_lea.sflag [#allocation3], %s649
        %s651 = sand.u32 %s214, 1
        %s652 = smul.addr %s651, 16
        %s653 = scalar_lea.vmem [#allocation2], %s652
        // Predicated region
        $region49: #{tpu_custom_call.1} parent=47 // pred_check
          %p654 = pneg %p224
        $region50: #{tpu_custom_call.1} parent=47 // pred_check_branch
          %656 = sbr.rel (%p654) target = $region52
        $region51: #{tpu_custom_call.1} parent=47 // pred_region
          %s658 = ssub.s32 256, 256
          %659 = vsyncadd %s650, %s658
          %s660 = smul.addr %s25, 2
          %s661 = sadd.s32 %s26, %s660
          %s662 = smul.addr %s661, 128
          %s663 = scalar_lea.hbm %s7, %s662
          %s664 = sshll.u32 %s653, 4
          %s665 = int_to_ptr.vmem [resolvable:$true] %s664
          %670 = dma.vmem_to_hbm [thread:$0]  %s665, 256, %s663, %s650, 128, 128, 8
        $region52: #{tpu_custom_call.1} parent=47 // pred_fallthru
          _
      $region48: #{tpu_custom_call.1} parent=5 // pred_fallthru
        _
      %p671 = scmp.le.s32.totalorder 2, %s16
      // Predicated region
      $region53: #{tpu_custom_call.1} parent=5 // pred_check
        %p672 = pneg %p671
      $region54: #{tpu_custom_call.1} parent=5 // pred_check_branch
        %674 = sbr.rel (%p672) target = $region56
      $region55: #{tpu_custom_call.1} parent=5 // pred_region
        %s675 = ssub.s32 %s16, 2
        // Predicated region
        $region57: #{tpu_custom_call.1} parent=55 // pred_check
          %p676 = pneg %p230
        $region58: #{tpu_custom_call.1} parent=55 // pred_check_branch
          %678 = sbr.rel (%p676) target = $region60
        $region59: #{tpu_custom_call.1} parent=55 // pred_region
          %s679 = sand.u32 %s215, 1
          %s680 = scalar_lea.sflag [#allocation3], %s679
          %s681 = sand.u32 %s215, 1
          %s682 = smul.addr %s681, 16
          %s683 = scalar_lea.vmem [#allocation2], %s682
          %684 = dma.done %s680, 256
        $region60: #{tpu_custom_call.1} parent=55 // pred_fallthru
          _
      $region56: #{tpu_custom_call.1} parent=5 // pred_fallthru
        _
    $region6: #{tpu_custom_call.1} parent=1 // loop_footer
      %s20 = sadd.s32 1, %s16
    $region7: #{tpu_custom_call.1} parent=1 // loop_footer_branch
      %15 = sbr.rel target = $region3
    $region8: #{tpu_custom_call.1} parent=1 // loop_exit
      _
    %685 = vsyncpa [#allocation3], 1
    %s686 = scalar_lea.sflag [#allocation3], 1
    %687 = vsyncpa %s686, 1

</llo_original>
